<compile_context>
chip_gen: v6e
topology: v6e:2x2x1
jax: 0.10.0
libtpu: 0.0.40
codegen_flags: <defaults>
</compile_context>

<pallas_src>
import functools

import jax
import jax.numpy as jnp
from jax.experimental import pallas as pl
from jax.experimental.pallas import tpu as pltpu


def _round_up(x, m):
    return ((x + m - 1) // m) * m


def _vmem_capacity_bytes():
    """Physical VMEM of the local chip; conservative (v7x-sized) fallback."""
    try:
        info = pltpu.get_tpu_info()
        cap = getattr(info, "vmem_capacity_bytes", None)
        if cap:
            return int(cap)
    except Exception:
        pass
    return 64 * 1024 * 1024


def _pick_row_tile(n, c, itemsize, per_buffer_budget):
    """Largest row tile whose (logits + lane-padded targets) block fits the
    per-pipeline-buffer budget; >= 2 tiles when there is enough work."""
    c_pad = max(_round_up(c, 128), 128)            # lane padding in VMEM
    bytes_per_row = c_pad * itemsize + 128 * 4     # logits tile + int32 targets tile
    tm = per_buffer_budget // bytes_per_row
    tm = min(tm, 8192)                             # bound per-step vector work
    tm = min(tm, _round_up(n, 8))                  # don't pad tiny batches
    if n >= 16 and tm >= n:
        # split into (at least) two tiles so the parallel grid axis can feed
        # both TensorCores on v7x
        tm = _round_up((n + 1) // 2, 8)
    tm = max(8, (int(tm) // 8) * 8)
    return int(tm)


def _focal_kernel(x_ref, t_ref, out_ref, *, gamma, ignore_index, tm, n_rows):
    i = pl.program_id(0)

    x = x_ref[...].astype(jnp.float32)                       # (tm, C) f32 math (v5e-safe)
    t = t_ref[...]                                            # (tm, 1) int32

    # ragged-edge handling: mask rows past the true batch size
    row = jax.lax.broadcasted_iota(jnp.int32, (tm, 1), 0) + i * tm
    valid = jnp.logical_and(t != ignore_index, row < n_rows)  # (tm, 1) bool

    # numerically-stable log-softmax pieces along the class (lane) axis
    m = jnp.max(x, axis=-1, keepdims=True)
    shifted = x - m
    lse = jnp.log(jnp.sum(jnp.exp(shifted), axis=-1, keepdims=True))   # (tm, 1)

    # fused gather: pick shifted[row, target[row]] via one-hot select, then
    # subtract the per-row LSE (full (tm, C) log-prob tile never built)
    col = jax.lax.broadcasted_iota(jnp.int32, x.shape, 1)
    gathered = jnp.sum(jnp.where(col == t, shifted, 0.0),
                       axis=-1, keepdims=True)                 # (tm, 1)
    logpt = gathered - lse                                     # (tm, 1)

    pt = jnp.exp(logpt)
    w = 1.0 - pt
    if float(gamma) == float(int(gamma)) and int(gamma) >= 0:
        fw = jnp.ones_like(w)                                  # strength-reduced pow
        for _ in range(int(gamma)):
            fw = fw * w
    else:
        fw = w ** jnp.float32(gamma)

    # select (not multiply): garbage-driven Inf/NaN in masked rows cannot leak
    loss = jnp.where(valid, -fw * logpt, 0.0)

    s = jnp.sum(loss)
    c = jnp.sum(jnp.where(valid, 1.0, 0.0))

    # single merged, lane-dense partial block: sum in sublane 0, count in sublane 1
    sub = jax.lax.broadcasted_iota(jnp.int32, out_ref.shape, 1)
    out_ref[...] = jnp.where(sub == 0, s, jnp.where(sub == 1, c, 0.0))


def ce_focal_loss(logits, targets, *, gamma=0.0, ignore_index=-1,
                  size_average=True, tm=None):
    """logits: (N, C) float, targets: (N,) int. Returns scalar float32."""
    if not gamma >= 0:
        raise ValueError(f"gamma :{gamma} must be larger than 0")
    N, C = logits.shape

    itemsize = jnp.dtype(logits.dtype).itemsize
    vmem_cap = _vmem_capacity_bytes()
    vmem_limit = min(int(vmem_cap * 3 // 4), 96 * 1024 * 1024)   # ~96 MiB on 128 MiB chips, ~48 MiB on v7x
    per_buffer_budget = min(8 * 1024 * 1024, vmem_limit // 8)    # ~6-8 MiB per pipeline buffer

    if tm is None:
        tm = _pick_row_tile(N, C, itemsize, per_buffer_budget)
    tm = max(8, (int(tm) // 8) * 8)

    num_tiles = pl.cdiv(N, tm)

    t2d = targets.reshape(N, 1).astype(jnp.int32)

    kernel = functools.partial(
        _focal_kernel, gamma=float(gamma), ignore_index=int(ignore_index),
        tm=int(tm), n_rows=int(N))

    parts = pl.pallas_call(
        kernel,
        out_shape=jax.ShapeDtypeStruct((num_tiles, 8, 128), jnp.float32),
        grid_spec=pltpu.PrefetchScalarGridSpec(
            num_scalar_prefetch=0,
            grid=(num_tiles,),
            in_specs=[
                pl.BlockSpec((tm, C), lambda i: (i, 0)),   # ragged last block OK
                pl.BlockSpec((tm, 1), lambda i: (i, 0)),
            ],
            out_specs=pl.BlockSpec((1, 8, 128), lambda i: (i, 0, 0)),
        ),
        compiler_params=pltpu.CompilerParams(
            dimension_semantics=("parallel",),      # megacore-shardable on v7x
            vmem_limit_bytes=int(vmem_limit),
        ),
    )(logits, t2d)

    total = jnp.sum(parts[:, 0, 0])
    if size_average:
        count = jnp.sum(parts[:, 1, 0])
        # NOTE: count == 0 (every row ignored) yields NaN, matching PyTorch's
        # mean over an empty selection.
        return total / count
    return total


def _reference(logits, targets, gamma, ignore_index, size_average):
    # pure-JAX reference mirroring the PyTorch module
    valid = targets != ignore_index
    logp = jax.nn.log_softmax(logits.astype(jnp.float32), axis=-1)
    logpt = jnp.take_along_axis(logp, targets.reshape(-1, 1).clip(0), axis=1)[:, 0]
    pt = jnp.exp(logpt)
    loss = -1.0 * (1.0 - pt) ** gamma * logpt
    loss = jnp.where(valid, loss, 0.0)
    if size_average:
        return jnp.sum(loss) / jnp.sum(valid)
    return jnp.sum(loss)


if __name__ == "__main__":
    key = jax.random.PRNGKey(0)

    def make_case(k, n, c, p_ignore, ignore_index):
        k1, k2, k3 = jax.random.split(k, 3)
        logits = jax.random.normal(k1, (n, c), dtype=jnp.float32)
        targets = jax.random.randint(k2, (n,), 0, c, dtype=jnp.int32)
        mask = jax.random.bernoulli(k3, p=p_ignore, shape=(n,))
        targets = jnp.where(mask, jnp.int32(ignore_index), targets)
        return logits, targets

    cases = [
        # (n,   c,  gamma, ignore_idx, size_avg, tm_override)
        (64,  16, 2.0, -1, True,  None),   # auto tile (split into 2 tiles)
        (100, 40, 1.5, -1, False, None),   # ragged last tile + non-integral gamma
        (50,  16, 2.0, -1, True,  16),     # forced multi-tile, ragged edge
        (200, 16, 0.0, -1, True,  32),     # gamma == 0 (plain masked CE mean)
    ]
    keys = jax.random.split(key, len(cases))
    for k, (n, c, g, ig, avg, tm_o) in zip(keys, cases):
        logits, targets = make_case(k, n, c, 0.25, ig)
        out = ce_focal_loss(logits, targets, gamma=g, ignore_index=ig,
                            size_average=avg, tm=tm_o)
        out = jax.block_until_ready(out)
        ref = _reference(logits, targets, g, ig, avg)
        assert jnp.allclose(out, ref, atol=1e-5, rtol=1e-4), (n, c, g, out, ref)

    print("KERNEL_OK")
</pallas_src>

<mosaic_0001>
module attributes {stable_mosaic.version = 11 : i64} {
  func.func @_focal_kernel(%arg0: i32, %arg1: memref<32x16xf32, #tpu.memory_space<vmem>>, %arg2: memref<32x1xi32, #tpu.memory_space<vmem>>, %arg3: memref<1x8x128xf32, #tpu.memory_space<vmem>>) attributes {dimension_semantics = [#tpu.dimension_semantics<parallel>], iteration_bounds = array<i64: 2>, scalar_prefetch = 0 : i64, scratch_operands = 0 : i64, tpu.core_type = #tpu.core_type<tc>, window_params = [{transform_indices = @transform_0, window_bounds = array<i64: 32, 16>}, {transform_indices = @transform_1, window_bounds = array<i64: 32, 1>}, {transform_indices = @transform_2, window_bounds = array<i64: 1, 8, 128>}]} {
    %c0 = arith.constant 0 : index
    %c0_0 = arith.constant 0 : index
    %0 = vector.load %arg1[%c0, %c0_0] : memref<32x16xf32, #tpu.memory_space<vmem>>, vector<32x16xf32>
    %c0_1 = arith.constant 0 : index
    %c0_2 = arith.constant 0 : index
    %1 = vector.load %arg2[%c0_1, %c0_2] : memref<32x1xi32, #tpu.memory_space<vmem>>, vector<32x1xi32>
    %2 = tpu.iota {dimensions = array<i32: 0>} : vector<32x1xi32>
    %c32_i32 = arith.constant 32 : i32
    %3 = arith.muli %arg0, %c32_i32 : i32
    %4 = vector.broadcast %3 : i32 to vector<32x1xi32>
    %5 = arith.addi %2, %4 : vector<32x1xi32>
    %c-1_i32 = arith.constant -1 : i32
    %6 = vector.broadcast %c-1_i32 : i32 to vector<32x1xi32>
    %7 = arith.cmpi ne, %1, %6 : vector<32x1xi32>
    %c64_i32 = arith.constant 64 : i32
    %8 = vector.broadcast %c64_i32 : i32 to vector<32x1xi32>
    %9 = arith.cmpi slt, %5, %8 : vector<32x1xi32>
    %10 = arith.andi %7, %9 : vector<32x1xi1>
    %cst = arith.constant dense<0xFF800000> : vector<32xf32>
    %11 = vector.multi_reduction <maximumf>, %0, %cst [1] : vector<32x16xf32> to vector<32xf32>
    %12 = vector.shape_cast %11 : vector<32xf32> to vector<32x1xf32>
    %13 = vector.broadcast %12 : vector<32x1xf32> to vector<32x16xf32>
    %14 = arith.subf %0, %13 : vector<32x16xf32>
    %15 = math.exp %14 : vector<32x16xf32>
    %cst_3 = arith.constant dense<0.000000e+00> : vector<32xf32>
    %16 = vector.multi_reduction <add>, %15, %cst_3 [1] : vector<32x16xf32> to vector<32xf32>
    %17 = vector.shape_cast %16 : vector<32xf32> to vector<32x1xf32>
    %18 = math.log %17 : vector<32x1xf32>
    %19 = tpu.iota {dimensions = array<i32: 1>} : vector<32x16xi32>
    %20 = vector.broadcast %1 : vector<32x1xi32> to vector<32x16xi32>
    %21 = arith.cmpi eq, %19, %20 : vector<32x16xi32>
    %cst_4 = arith.constant 0.000000e+00 : f32
    %22 = vector.broadcast %cst_4 : f32 to vector<32x16xf32>
    %23 = arith.select %21, %14, %22 : vector<32x16xi1>, vector<32x16xf32>
    %cst_5 = arith.constant dense<0.000000e+00> : vector<32xf32>
    %24 = vector.multi_reduction <add>, %23, %cst_5 [1] : vector<32x16xf32> to vector<32xf32>
    %25 = vector.shape_cast %24 : vector<32xf32> to vector<32x1xf32>
    %26 = arith.subf %25, %18 : vector<32x1xf32>
    %27 = math.exp %26 : vector<32x1xf32>
    %cst_6 = arith.constant 1.000000e+00 : f32
    %28 = vector.broadcast %cst_6 : f32 to vector<32x1xf32>
    %29 = arith.subf %28, %27 : vector<32x1xf32>
    %cst_7 = arith.constant 1.000000e+00 : f32
    %30 = vector.broadcast %cst_7 : f32 to vector<32x1xf32>
    %31 = arith.mulf %30, %29 : vector<32x1xf32>
    %32 = arith.mulf %31, %29 : vector<32x1xf32>
    %cst_8 = arith.constant 0.000000e+00 : f32
    %33 = vector.broadcast %cst_8 : f32 to vector<32x1xf32>
    %34 = arith.subf %33, %32 : vector<32x1xf32>
    %35 = arith.mulf %34, %26 : vector<32x1xf32>
    %cst_9 = arith.constant 0.000000e+00 : f32
    %36 = vector.broadcast %cst_9 : f32 to vector<32x1xf32>
    %37 = arith.select %10, %35, %36 : vector<32x1xi1>, vector<32x1xf32>
    %38 = vector.shape_cast %37 : vector<32x1xf32> to vector<1x32x1xf32>
    %cst_10 = arith.constant dense<0.000000e+00> : vector<1xf32>
    %39 = vector.multi_reduction <add>, %38, %cst_10 [1, 2] : vector<1x32x1xf32> to vector<1xf32>
    %40 = vector.shape_cast %39 : vector<1xf32> to vector<1x1x1xf32>
    %41 = vector.extract %40[0, 0, 0] : f32 from vector<1x1x1xf32>
    %cst_11 = arith.constant 1.000000e+00 : f32
    %cst_12 = arith.constant 0.000000e+00 : f32
    %42 = vector.broadcast %cst_11 : f32 to vector<32x1xf32>
    %43 = vector.broadcast %cst_12 : f32 to vector<32x1xf32>
    %44 = arith.select %10, %42, %43 : vector<32x1xi1>, vector<32x1xf32>
    %45 = vector.shape_cast %44 : vector<32x1xf32> to vector<1x32x1xf32>
    %cst_13 = arith.constant dense<0.000000e+00> : vector<1xf32>
    %46 = vector.multi_reduction <add>, %45, %cst_13 [1, 2] : vector<1x32x1xf32> to vector<1xf32>
    %47 = vector.shape_cast %46 : vector<1xf32> to vector<1x1x1xf32>
    %48 = vector.extract %47[0, 0, 0] : f32 from vector<1x1x1xf32>
    %49 = tpu.iota {dimensions = array<i32: 1>} : vector<1x8x128xi32>
    %c0_i32 = arith.constant 0 : i32
    %50 = vector.broadcast %c0_i32 : i32 to vector<1x8x128xi32>
    %51 = arith.cmpi eq, %49, %50 : vector<1x8x128xi32>
    %c1_i32 = arith.constant 1 : i32
    %52 = vector.broadcast %c1_i32 : i32 to vector<1x8x128xi32>
    %53 = arith.cmpi eq, %49, %52 : vector<1x8x128xi32>
    %cst_14 = arith.constant 0.000000e+00 : f32
    %54 = vector.broadcast %48 : f32 to vector<1x8x128xf32>
    %55 = vector.broadcast %cst_14 : f32 to vector<1x8x128xf32>
    %56 = arith.select %53, %54, %55 : vector<1x8x128xi1>, vector<1x8x128xf32>
    %57 = vector.broadcast %41 : f32 to vector<1x8x128xf32>
    %58 = arith.select %51, %57, %56 : vector<1x8x128xi1>, vector<1x8x128xf32>
    %c0_15 = arith.constant 0 : index
    %c0_16 = arith.constant 0 : index
    %c0_17 = arith.constant 0 : index
    %59 = vector.load %arg3[%c0_15, %c0_16, %c0_17] : memref<1x8x128xf32, #tpu.memory_space<vmem>>, vector<1x8x128xf32>
    tpu.vector_store %arg3[%c0_15, %c0_16, %c0_17], %58 {strides = array<i32>} : memref<1x8x128xf32, #tpu.memory_space<vmem>>, vector<1x8x128xf32>,
    return
  }
  func.func @transform_0(%arg0: i32) -> (i32, i32) {
    %c0_i32 = arith.constant 0 : i32
    %c0_i32_0 = arith.constant 0 : i32
    return %arg0, %c0_i32 : i32, i32
  }
  func.func @transform_1(%arg0: i32) -> (i32, i32) {
    %c0_i32 = arith.constant 0 : i32
    %c0_i32_0 = arith.constant 0 : i32
    return %arg0, %c0_i32 : i32, i32
  }
  func.func @transform_2(%arg0: i32) -> (i32, i32, i32) {
    %c0_i32 = arith.constant 0 : i32
    %c0_i32_0 = arith.constant 0 : i32
    %c0_i32_1 = arith.constant 0 : i32
    return %arg0, %c0_i32, %c0_i32_0 : i32, i32, i32
  }
}

</mosaic_0001>

<llo_original>
// kernel: tpu_custom_call.1
$region0: #{tpu_custom_call.1}
  #allocation0 [shape = 'u32[]', space=smem, size = 0x4, offset = 0x4, fixed_abs, tag = 'smem constant byte address 0x4 - core index']
  #allocation1 [shape = 'u32[144,128]{1,0:T(1,128)}', space=vmem, size = 0x12000, scoped, tag = 'internal scratch']
  %s0 = inlined_call_operand.vmem [shape: f32[64,16], index: 0, kind: input, shape index: {}]
  %s1 = inlined_call_operand.vmem [shape: s32[64,1], index: 1, kind: input, shape index: {}]
  %s2 = inlined_call_operand.hbm [shape: f32[2,8,128], index: 2, kind: output, shape index: {}]
  %s3 = sld [smem:[#allocation0]]
  $region41: #{tpu_custom_call.1} parent=0
    _
  %s5 = ssub.s32 1, %s3
  %s6 = scalar_select 0, %s5, %s3
  $region1: #{tpu_custom_call.1} parent=0
    #allocation2 [shape = 'u8[8192]{0}', space=vmem, size = 0x2000, scoped, tag = 'output window, operand 0']
    #allocation3 [shape = 's32[2]{0}', space=sflag, size = 0x8, scoped, tag = 'scoped memory for tpu_custom_call.1']
    %7 = vsyncpa [#allocation3], 0
    %s8 = scalar_lea.sflag [#allocation3], 1
    %9 = vsyncpa %s8, 0
    loop: start=0, step=1, limit=4
    $region2: #{tpu_custom_call.1} parent=1 // loop_pre_header
      _
    $region3: #{tpu_custom_call.1} parent=1 // loop_header
      %s11 = sphi 0, %s15
      %p12 = scmp.ge.s32.totalorder %s11, 4
      %s21 = sphi 0, %s23
      %s24 = sphi 0, %s21
      %s25 = sphi 0, %s24
      %s41 = sphi 0, %s25
      %s47 = sphi 0, %s49
      %s50 = sphi 0, %s47
      %s51 = sphi 0, %s50
      %s67 = sphi 0, %s51
      %s73 = sphi 0, %s75
      %s76 = sphi 0, %s73
      %s77 = sphi 0, %s76
      %s93 = sphi 0, %s77
    $region4: #{tpu_custom_call.1} parent=1 // loop_header_branch
      %14 = sbr.rel (%p12) target = $region8
    $region5: #{tpu_custom_call.1} parent=1 // loop_body
      %s16 = ssub.s32 %s11, 1
      %s17 = ssub.s32 %s11, 2
      %s18 = sadd.s32 %s11, 1
      %s19 = ssub.s32 %s11, %s18
      %p20 = scmp.eq.s32.totalorder %s19, 0
      %s22 = sadd.s32 %s21, 1
      %s23 = scalar_select %p20, %s21, %s22
      %p26 = pneg %p20
      %p27 = scmp.eq.s32.totalorder %s11, 1
      %p28 = por %p26, %p27
      %p29 = scmp.ne.s32.totalorder %s21, %s24
      %p30 = scmp.eq.s32.totalorder %s11, 0
      %p31 = por %p29, %p30
      %p32 = scmp.ne.s32.totalorder %s21, %s24
      %p33 = scmp.eq.s32.totalorder %s16, 1
      %p34 = por %p32, %p33
      %p35 = scmp.ne.s32.totalorder %s24, %s25
      %p36 = scmp.eq.s32.totalorder %s16, 0
      %p37 = por %p35, %p36
      %p38 = scmp.ne.s32.totalorder %s24, %s25
      %p39 = scmp.eq.s32.totalorder %s17, 1
      %p40 = por %p38, %p39
      %p42 = scmp.ne.s32.totalorder %s25, %s41
      %p43 = scmp.eq.s32.totalorder %s17, 0
      %p44 = por %p42, %p43
      %s45 = ssub.s32 %s11, %s18
      %p46 = scmp.eq.s32.totalorder %s45, 0
      %s48 = sadd.s32 %s47, 1
      %s49 = scalar_select %p46, %s47, %s48
      %p52 = pneg %p46
      %p53 = scmp.eq.s32.totalorder %s11, 1
      %p54 = por %p52, %p53
      %p55 = scmp.ne.s32.totalorder %s47, %s50
      %p56 = scmp.eq.s32.totalorder %s11, 0
      %p57 = por %p55, %p56
      %p58 = scmp.ne.s32.totalorder %s47, %s50
      %p59 = scmp.eq.s32.totalorder %s16, 1
      %p60 = por %p58, %p59
      %p61 = scmp.ne.s32.totalorder %s50, %s51
      %p62 = scmp.eq.s32.totalorder %s16, 0
      %p63 = por %p61, %p62
      %p64 = scmp.ne.s32.totalorder %s50, %s51
      %p65 = scmp.eq.s32.totalorder %s17, 1
      %p66 = por %p64, %p65
      %p68 = scmp.ne.s32.totalorder %s51, %s67
      %p69 = scmp.eq.s32.totalorder %s17, 0
      %p70 = por %p68, %p69
      %s71 = ssub.s32 %s11, %s18
      %p72 = scmp.eq.s32.totalorder %s71, 0
      %s74 = sadd.s32 %s73, 1
      %s75 = scalar_select %p72, %s73, %s74
      %p78 = pneg %p72
      %p79 = scmp.eq.s32.totalorder %s11, 1
      %p80 = por %p78, %p79
      %p81 = scmp.ne.s32.totalorder %s73, %s76
      %p82 = scmp.eq.s32.totalorder %s11, 0
      %p83 = por %p81, %p82
      %p84 = scmp.ne.s32.totalorder %s73, %s76
      %p85 = scmp.eq.s32.totalorder %s16, 1
      %p86 = por %p84, %p85
      %p87 = scmp.ne.s32.totalorder %s76, %s77
      %p88 = scmp.eq.s32.totalorder %s16, 0
      %p89 = por %p87, %p88
      %p90 = scmp.ne.s32.totalorder %s76, %s77
      %p91 = scmp.eq.s32.totalorder %s17, 1
      %p92 = por %p90, %p91
      %p94 = scmp.ne.s32.totalorder %s77, %s93
      %p95 = scmp.eq.s32.totalorder %s17, 0
      %p96 = por %p94, %p95
      %p97 = scmp.le.s32.totalorder 1, %s11
      %p98 = scmp.lt.s32.totalorder %s11, 3
      %p99 = pnand %p97, %p98
      %p100 = pneg %p99
      // Predicated region
      $region9: #{tpu_custom_call.1} parent=5 // pred_check
        _
      $region10: #{tpu_custom_call.1} parent=5 // pred_check_branch
        %102 = sbr.rel (%p99) target = $region12
      $region11: #{tpu_custom_call.1} parent=5 // pred_region
        %s103 = ssub.s32 %s11, 1
      $region12: #{tpu_custom_call.1} parent=5 // pred_fallthru
        _
      %p104 = scmp.lt.s32.totalorder %s11, 2
      // Predicated region
      $region13: #{tpu_custom_call.1} parent=5 // pred_check
        %p105 = pneg %p104
      $region14: #{tpu_custom_call.1} parent=5 // pred_check_branch
        %107 = sbr.rel (%p105) target = $region16
      $region15: #{tpu_custom_call.1} parent=5 // pred_region
        // Predicated region
        $region17: #{tpu_custom_call.1} parent=15 // pred_check
          %p108 = pneg %p31
        $region18: #{tpu_custom_call.1} parent=15 // pred_check_branch
          %110 = sbr.rel (%p108) target = $region20
        $region19: #{tpu_custom_call.1} parent=15 // pred_region
          %s111 = smul.u32 4, %s11
          %p112 = scmp.lt.s32.totalorder %s111, 7
          %s113 = scalar_select %p112, %s111, 7
          %s114 = smul.addr %s113, 8
          %s115 = scalar_lea.vmem %s0, %s114
          %s116 = smul.u32 4, %s11
        $region20: #{tpu_custom_call.1} parent=15 // pred_fallthru
          _
        // Predicated region
        $region21: #{tpu_custom_call.1} parent=15 // pred_check
          %p117 = pneg %p57
        $region22: #{tpu_custom_call.1} parent=15 // pred_check_branch
          %119 = sbr.rel (%p117) target = $region24
        $region23: #{tpu_custom_call.1} parent=15 // pred_region
          %s120 = smul.u32 4, %s11
          %p121 = scmp.lt.s32.totalorder %s120, 7
          %s122 = scalar_select %p121, %s120, 7
          %s123 = smul.addr %s122, 8
          %s124 = scalar_lea.vmem %s1, %s123
          %s125 = smul.u32 4, %s11
        $region24: #{tpu_custom_call.1} parent=15 // pred_fallthru
          _
      $region16: #{tpu_custom_call.1} parent=5 // pred_fallthru
        _
      %p126 = scmp.le.s32.totalorder 1, %s11
      %p127 = scmp.lt.s32.totalorder %s11, 3
      %p128 = pnand %p126, %p127
      %p129 = pneg %p128
      // Predicated region
      $region25: #{tpu_custom_call.1} parent=5 // pred_check
        _
      $region26: #{tpu_custom_call.1} parent=5 // pred_check_branch
        %131 = sbr.rel (%p128) target = $region28
      $region27: #{tpu_custom_call.1} parent=5 // pred_region
        %s132 = ssub.s32 %s11, 1
        %s133 = smul.u32 4, %s16
        %p134 = scmp.lt.s32.totalorder %s133, 7
        %s135 = scalar_select %p134, %s133, 7
        %s136 = smul.addr %s135, 8
        %s137 = scalar_lea.vmem %s0, %s136
        %p138 = pneg %p37
        %p139 = pneg %p34
        %s140 = smul.u32 4, %s16
        %p141 = scmp.lt.s32.totalorder %s140, 7
        %s142 = scalar_select %p141, %s140, 7
        %s143 = smul.addr %s142, 8
        %s144 = scalar_lea.vmem %s1, %s143
        %p145 = pneg %p63
        %p146 = pneg %p60
        %p147 = pneg %p89
        %p148 = pneg %p86
        %s149 = sand.u32 %s76, 1
        %s150 = scalar_lea.sflag [#allocation3], %s149
        %s151 = sand.u32 %s76, 1
        %s152 = smul.addr %s151, 8
        %s153 = scalar_lea.vmem [#allocation2], %s152
        %s154 = smul.u32 4, %s16
        %p155 = scmp.lt.s32.totalorder %s154, 7
        %s156 = scalar_select %p155, %s154, 7
        %s157 = smul.addr %s156, 8
        %s158 = scalar_lea.vmem %s0, %s157
        %s159 = smul.u32 4, %s16
        %s160 = smul.u32 4, %s16
        %p161 = scmp.lt.s32.totalorder %s160, 7
        %s162 = scalar_select %p161, %s160, 7
        %s163 = smul.addr %s162, 8
        %s164 = scalar_lea.vmem %s1, %s163
        %s165 = smul.u32 4, %s16
        %v166 = vld [vmem:[%s158] sm:$0xff]
        %v167 = vld [vmem:[%s158 + $0x8] sm:$0xff]
        %v168 = vld [vmem:[%s158 + $0x10] sm:$0xff]
        %v169 = vld [vmem:[%s158 + $0x18] sm:$0xff]
        %v170 = vld [vmem:[%s164] sm:$0xff]
        %v171 = vld [vmem:[%s164 + $0x8] sm:$0xff]
        %v172 = vld [vmem:[%s164 + $0x10] sm:$0xff]
        %v173 = vld [vmem:[%s164 + $0x18] sm:$0xff]
        %v174 = vlaneseq
        %v175 = vshrl.u32 %v174, 7
        %v176 = vadd.s32 %v175, 8
        %v177 = vadd.s32 %v175, 16
        %v178 = vadd.s32 %v175, 24
        %s179 = smul.u32 %s16, 32
        %v180 = vstv %s179
        %v181 = vadd.s32 %v175, %v180
        %v182 = vadd.s32 %v176, %v180
        %v183 = vadd.s32 %v177, %v180
        %v184 = vadd.s32 %v178, %v180
        %vm185 = vcmp.ne.s32.totalorder %v170, 4294967295
        %vm186 = vcmp.ne.s32.totalorder %v171, 4294967295
        %vm187 = vcmp.ne.s32.totalorder %v172, 4294967295
        %vm188 = vcmp.ne.s32.totalorder %v173, 4294967295
        %vm189 = vcmp.lt.s32.totalorder %v181, 64
        %vm190 = vcmp.lt.s32.totalorder %v182, 64
        %vm191 = vcmp.lt.s32.totalorder %v183, 64
        %vm192 = vcmp.lt.s32.totalorder %v184, 64
        %vm193 = vmand %vm185, %vm189
        %vm194 = vmand %vm186, %vm190
        %vm195 = vmand %vm187, %vm191
        %vm196 = vmand %vm188, %vm192
        %vm197 = vcmask 130048
        %v198 = vsel %vm197, %v166, -inf
        %199 = vmax.xlane.f32.xlu0 %v198
        %v200 = vpop.xlane.xlu0 %199
        %v201 = vsel %vm197, %v167, -inf
        %202 = vmax.xlane.f32.xlu0 %v201
        %v203 = vpop.xlane.xlu0 %202
        %v204 = vsel %vm197, %v168, -inf
        %205 = vmax.xlane.f32.xlu0 %v204
        %v206 = vpop.xlane.xlu0 %205
        %v207 = vsel %vm197, %v169, -inf
        %208 = vmax.xlane.f32.xlu0 %v207
        %v209 = vpop.xlane.xlu0 %208
        %v210 = vsub.f32 %v166, %v200
        %v211 = vsub.f32 %v167, %v203
        %v212 = vsub.f32 %v168, %v206
        %v213 = vsub.f32 %v169, %v209
        %v214 = vmul.f32 %v210, 1.442695
        %v215 = vpow.pop %v214
        %v216 = vmul.f32 %v211, 1.442695
        %v217 = vpow.pop %v216
        %v218 = vmul.f32 %v212, 1.442695
        %v219 = vpow.pop %v218
        %v220 = vmul.f32 %v213, 1.442695
        %v221 = vpow.pop %v220
        %v222 = vsel %vm197, %v215, 0.0
        %223 = vadd.xlane.f32.xlu0 %v222
        %v224 = vpop.xlane.xlu0 %223
        %v225 = vsel %vm197, %v217, 0.0
        %226 = vadd.xlane.f32.xlu0 %v225
        %v227 = vpop.xlane.xlu0 %226
        %v228 = vsel %vm197, %v219, 0.0
        %229 = vadd.xlane.f32.xlu0 %v228
        %v230 = vpop.xlane.xlu0 %229
        %v231 = vsel %vm197, %v221, 0.0
        %232 = vadd.xlane.f32.xlu0 %v231
        %v233 = vpop.xlane.xlu0 %232
        %v234 = vlog2.pop %v224
        %v235 = vmul.f32 %v234, 0.6931472
        %v236 = vlog2.pop %v227
        %v237 = vmul.f32 %v236, 0.6931472
        %v238 = vlog2.pop %v230
        %v239 = vmul.f32 %v238, 0.6931472
        %v240 = vlog2.pop %v233
        %v241 = vmul.f32 %v240, 0.6931472
        %v242 = vlaneseq
        %v243 = vand.u32 %v242, 127
        %244 = vset.pattern.permute.xlu0 0
        %245 = vperm.xlu0 %244, %v170
        %v246 = vpop.permute.xlu0 %245
        %247 = vset.pattern.permute.xlu0 0
        %248 = vperm.xlu0 %247, %v171
        %v249 = vpop.permute.xlu0 %248
        %250 = vset.pattern.permute.xlu0 0
        %251 = vperm.xlu0 %250, %v172
        %v252 = vpop.permute.xlu0 %251
        %253 = vset.pattern.permute.xlu0 0
        %254 = vperm.xlu0 %253, %v173
        %v255 = vpop.permute.xlu0 %254
        %vm256 = vcmp.eq.s32.totalorder %v243, %v246
        %vm257 = vcmp.eq.s32.totalorder %v243, %v249
        %vm258 = vcmp.eq.s32.totalorder %v243, %v252
        %vm259 = vcmp.eq.s32.totalorder %v243, %v255
        %v260 = vsel %vm256, %v210, 0.0
        %v261 = vsel %vm257, %v211, 0.0
        %v262 = vsel %vm258, %v212, 0.0
        %v263 = vsel %vm259, %v213, 0.0
        %v264 = vsel %vm197, %v260, 0.0
        %265 = vadd.xlane.f32.xlu0 %v264
        %v266 = vpop.xlane.xlu0 %265
        %v267 = vsel %vm197, %v261, 0.0
        %268 = vadd.xlane.f32.xlu0 %v267
        %v269 = vpop.xlane.xlu0 %268
        %v270 = vsel %vm197, %v262, 0.0
        %271 = vadd.xlane.f32.xlu0 %v270
        %v272 = vpop.xlane.xlu0 %271
        %v273 = vsel %vm197, %v263, 0.0
        %274 = vadd.xlane.f32.xlu0 %v273
        %v275 = vpop.xlane.xlu0 %274
        %v276 = vsub.f32 %v266, %v235
        %v277 = vsub.f32 %v269, %v237
        %v278 = vsub.f32 %v272, %v239
        %v279 = vsub.f32 %v275, %v241
        %v280 = vmul.f32 %v276, 1.442695
        %v281 = vpow.pop %v280
        %v282 = vmul.f32 %v277, 1.442695
        %v283 = vpow.pop %v282
        %v284 = vmul.f32 %v278, 1.442695
        %v285 = vpow.pop %v284
        %v286 = vmul.f32 %v279, 1.442695
        %v287 = vpow.pop %v286
        %v288 = vsub.f32 1.0, %v281
        %v289 = vsub.f32 1.0, %v283
        %v290 = vsub.f32 1.0, %v285
        %v291 = vsub.f32 1.0, %v287
        %v292 = vmul.f32 %v288, %v288
        %v293 = vmul.f32 %v289, %v289
        %v294 = vmul.f32 %v290, %v290
        %v295 = vmul.f32 %v291, %v291
        %v296 = vsub.f32 0.0, %v292
        %v297 = vsub.f32 0.0, %v293
        %v298 = vsub.f32 0.0, %v294
        %v299 = vsub.f32 0.0, %v295
        %v300 = vmul.f32 %v296, %v276
        %v301 = vmul.f32 %v297, %v277
        %v302 = vmul.f32 %v298, %v278
        %v303 = vmul.f32 %v299, %v279
        %v304 = vsel %vm193, %v300, 0.0
        %v305 = vsel %vm194, %v301, 0.0
        %v306 = vsel %vm195, %v302, 0.0
        %v307 = vsel %vm196, %v303, 0.0
        %vm308 = vcmask 7168
        %v309 = vsel %vm308, %v304, 0.0
        %v310 = vsel %vm308, %v305, 0.0
        %v311 = vadd.f32 %v309, %v310
        %v312 = vsel %vm308, %v306, 0.0
        %v313 = vadd.f32 %v311, %v312
        %v314 = vsel %vm308, %v307, 0.0
        %v315 = vadd.f32 %v313, %v314
        %316 = vadd.xlane.f32.xlu0 %v315
        %v317 = vpop.xlane.xlu0 %316
        %v318 = vrot.slane %v317, 4
        %v319 = vadd.f32 %v317, %v318
        %v320 = vrot.slane %v319, 2
        %v321 = vadd.f32 %v319, %v320
        %v322 = vrot.slane %v321, 1
        %v323 = vadd.f32 %v321, %v322
        %s324 = vtos %v323
        %v325 = vsel %vm193, 1.0, 0.0
        %v326 = vsel %vm194, 1.0, 0.0
        %v327 = vsel %vm195, 1.0, 0.0
        %v328 = vsel %vm196, 1.0, 0.0
        %v329 = vsel %vm308, %v325, 0.0
        %v330 = vsel %vm308, %v326, 0.0
        %v331 = vadd.f32 %v329, %v330
        %v332 = vsel %vm308, %v327, 0.0
        %v333 = vadd.f32 %v331, %v332
        %v334 = vsel %vm308, %v328, 0.0
        %v335 = vadd.f32 %v333, %v334
        %336 = vadd.xlane.f32.xlu0 %v335
        %v337 = vpop.xlane.xlu0 %336
        %v338 = vrot.slane %v337, 4
        %v339 = vadd.f32 %v337, %v338
        %v340 = vrot.slane %v339, 2
        %v341 = vadd.f32 %v339, %v340
        %v342 = vrot.slane %v341, 1
        %v343 = vadd.f32 %v341, %v342
        %s344 = vtos %v343
        %vm345 = vcmp.eq.s32.totalorder %v175, 0
        %vm346 = vcmp.eq.s32.totalorder %v175, 1
        %v347 = vstv %s344
        %v348 = vsel %vm346, %v347, 0.0
        %v349 = vstv %s324
        %v350 = vsel %vm345, %v349, %v348
        %351 = vst [vmem:[%s153] sm:$0xff] %v350
        %s352 = sand.u32 %s76, 1
        %s353 = scalar_lea.sflag [#allocation3], %s352
        %s354 = sand.u32 %s76, 1
        %s355 = smul.addr %s354, 8
        %s356 = scalar_lea.vmem [#allocation2], %s355
        // Predicated region
        $region29: #{tpu_custom_call.1} parent=27 // pred_check
          %p357 = pneg %p86
        $region30: #{tpu_custom_call.1} parent=27 // pred_check_branch
          %359 = sbr.rel (%p357) target = $region32
        $region31: #{tpu_custom_call.1} parent=27 // pred_region
          %s361 = ssub.s32 128, 128
          %362 = vsyncadd %s353, %s361
          %s363 = smul.addr %s16, 128
          %s364 = scalar_lea.hbm %s2, %s363
          %s366 = sshll.u32 %s356, 4
          %s367 = int_to_ptr.vmem [resolvable:$true] %s366
          %369 = dma.vmem_to_hbm [thread:$0]  %s367, 128, %s364, %s353
        $region32: #{tpu_custom_call.1} parent=27 // pred_fallthru
          _
      $region28: #{tpu_custom_call.1} parent=5 // pred_fallthru
        _
      %p370 = scmp.le.s32.totalorder 2, %s11
      // Predicated region
      $region33: #{tpu_custom_call.1} parent=5 // pred_check
        %p371 = pneg %p370
      $region34: #{tpu_custom_call.1} parent=5 // pred_check_branch
        %373 = sbr.rel (%p371) target = $region36
      $region35: #{tpu_custom_call.1} parent=5 // pred_region
        %s374 = ssub.s32 %s11, 2
        // Predicated region
        $region37: #{tpu_custom_call.1} parent=35 // pred_check
          %p375 = pneg %p92
        $region38: #{tpu_custom_call.1} parent=35 // pred_check_branch
          %377 = sbr.rel (%p375) target = $region40
        $region39: #{tpu_custom_call.1} parent=35 // pred_region
          %s378 = sand.u32 %s77, 1
          %s379 = scalar_lea.sflag [#allocation3], %s378
          %s380 = sand.u32 %s77, 1
          %s381 = smul.addr %s380, 8
          %s382 = scalar_lea.vmem [#allocation2], %s381
          %383 = dma.done %s379, 128
        $region40: #{tpu_custom_call.1} parent=35 // pred_fallthru
          _
      $region36: #{tpu_custom_call.1} parent=5 // pred_fallthru
        _
    $region6: #{tpu_custom_call.1} parent=1 // loop_footer
      %s15 = sadd.s32 1, %s11
    $region7: #{tpu_custom_call.1} parent=1 // loop_footer_branch
      %10 = sbr.rel target = $region3
    $region8: #{tpu_custom_call.1} parent=1 // loop_exit
      _
    %384 = vsyncpa [#allocation3], 1
    %s385 = scalar_lea.sflag [#allocation3], 1
    %386 = vsyncpa %s385, 1

</llo_original>
